<compile_context>
chip_gen: v6e
topology: v6e:2x2x1
jax: 0.10.0
libtpu: 0.0.40
codegen_flags: <defaults>
</compile_context>

<pallas_src>
import functools

import jax
import jax.numpy as jnp
from jax.experimental import pallas as pl
from jax.experimental.pallas import tpu as pltpu


def _round_up(v, m):
    return (v + m - 1) // m * m


def _pad2d(x, rows, cols):
    return jnp.pad(x, ((0, rows - x.shape[0]), (0, cols - x.shape[1])))


# ----------------------------------------------------------------------------
# Pallas kernel: one GCN layer   out = A_norm @ (X @ W) + b   (optional ReLU)
# Tiled over node rows (grid axis 0, parallel) and the N-sized contraction
# axis of A_norm (grid axis 1, arbitrary, reduction-last).
# ----------------------------------------------------------------------------
def gcn_layer_kernel(a_ref, x_ref, w_ref, b_ref, o_ref, acc_ref, *, apply_relu):
    k = pl.program_id(1)

    @pl.when(k == 0)
    def _():
        acc_ref[...] = jnp.zeros_like(acc_ref)

    # (tk, Fo) = X_tile @ W     -- bf16 operands, f32 MXU accumulation
    xw = jnp.dot(x_ref[...], w_ref[...], preferred_element_type=jnp.float32)
    # (tm, Fo) += A_tile @ XW   -- cast back to bf16 to stay on the fast bf16
    #                              MXU path; running sum stays f32 in VMEM.
    acc_ref[...] += jnp.dot(
        a_ref[...], xw.astype(jnp.bfloat16), preferred_element_type=jnp.float32
    )

    # Epilogue: bias + activation exactly once, after the last k-tile.
    @pl.when(k == pl.num_programs(1) - 1)
    def _():
        out = acc_ref[...] + b_ref[...]
        if apply_relu:
            out = jnp.maximum(out, 0.0)
        o_ref[...] = out.astype(o_ref.dtype)


def gcn_layer(a_bf, x_bf, w_bf, b_f32, *, apply_relu, out_dtype, tm=128, tk=128):
    np_, _ = a_bf.shape
    fi = x_bf.shape[1]
    fo = w_bf.shape[1]
    assert np_ % tm == 0 and np_ % tk == 0

    grid = (np_ // tm, np_ // tk)
    n_row_tiles = grid[0]

    flops = 2 * np_ * np_ * fo + 2 * n_row_tiles * np_ * fi * fo
    bytes_accessed = (
        np_ * np_ * 2                     # A_norm (bf16)
        + n_row_tiles * np_ * fi * 2      # X re-streamed per row tile (bf16)
        + fi * fo * 2                     # W (bf16)
        + fo * 4                          # bias (f32)
        + np_ * fo * jnp.dtype(out_dtype).itemsize
    )

    kernel = functools.partial(gcn_layer_kernel, apply_relu=apply_relu)
    return pl.pallas_call(
        kernel,
        out_shape=jax.ShapeDtypeStruct((np_, fo), out_dtype),
        grid_spec=pltpu.PrefetchScalarGridSpec(
            num_scalar_prefetch=0,
            grid=grid,
            in_specs=[
                pl.BlockSpec((tm, tk), lambda i, k: (i, k)),  # A_norm tile
                pl.BlockSpec((tk, fi), lambda i, k: (k, 0)),  # X tile (k rows)
                pl.BlockSpec((fi, fo), lambda i, k: (0, 0)),  # W (whole)
                pl.BlockSpec((1, fo), lambda i, k: (0, 0)),   # bias (whole)
            ],
            out_specs=pl.BlockSpec((tm, fo), lambda i, k: (i, 0)),
            scratch_shapes=[pltpu.VMEM((tm, fo), jnp.float32)],
        ),
        compiler_params=pltpu.CompilerParams(
            dimension_semantics=("parallel", "arbitrary"),
            vmem_limit_bytes=48 * 1024 * 1024,
        ),
        cost_estimate=pl.CostEstimate(
            flops=flops, transcendentals=0, bytes_accessed=bytes_accessed
        ),
    )(a_bf, x_bf, w_bf, b_f32)


def gnn_q_forward(a_norm, x, w1, b1, w2, b2, *, tm=128, tk=128):
    """out = A (relu(A X W1 + b1)) W2 + b2 as two tiled Pallas GCN-layer passes."""
    n = x.shape[0]
    fin, hid = w1.shape
    dout = w2.shape[1]

    np_ = _round_up(n, max(tm, tk))
    fin_p = _round_up(fin, 128)
    hid_p = _round_up(hid, 128)
    dout_p = _round_up(dout, 128)

    # bf16 operands (halves traffic for the O(N^2) adjacency); zero padding is
    # exact: padded A rows/cols are zero, padded W cols/rows are zero.
    a_p = _pad2d(a_norm, np_, np_).astype(jnp.bfloat16)
    x_p = _pad2d(x, np_, fin_p).astype(jnp.bfloat16)
    w1_p = _pad2d(w1, fin_p, hid_p).astype(jnp.bfloat16)
    b1_p = _pad2d(b1, 1, hid_p).astype(jnp.float32)
    w2_p = _pad2d(w2, hid_p, dout_p).astype(jnp.bfloat16)
    b2_p = _pad2d(b2, 1, dout_p).astype(jnp.float32)

    # Layer 1 (+ReLU); hidden activation kept bf16 for layer 2's MXU pass.
    h = gcn_layer(a_p, x_p, w1_p, b1_p,
                  apply_relu=True, out_dtype=jnp.bfloat16, tm=tm, tk=tk)

    # F.dropout(x, training=self.training): inference mode => identity.
    # TODO(synk): add pltpu.prng_random_bits-based in-kernel dropout mask if
    # training-mode semantics (p=0.5 with 1/(1-p) scaling) are ever required.

    # Layer 2 (no activation); f32, lane-dense 128-wide output slab.
    out = gcn_layer(a_p, h, w2_p, b2_p,
                    apply_relu=False, out_dtype=jnp.float32, tm=tm, tk=tk)
    return out[:n, :dout]


# ----------------------------------------------------------------------------
# Glue: GCN-normalized dense adjacency from edge_index (PyG gcn_norm semantics:
# scatter-ADD edges so duplicates are counted, add self loops, D^-1/2 A D^-1/2).
# ----------------------------------------------------------------------------
def gcn_normalized_adjacency(edge_index, num_nodes):
    src = edge_index[0]
    dst = edge_index[1]
    non_self = (src != dst).astype(jnp.float32)
    adj = jnp.zeros((num_nodes, num_nodes), dtype=jnp.float32)
    # message flows source -> target:  out[i] = sum_j A[i, j] * x[j]
    adj = adj.at[dst, src].add(non_self)          # duplicate edges accumulate
    adj = adj + jnp.eye(num_nodes, dtype=jnp.float32)  # self loops (weight 1)
    deg = jnp.sum(adj, axis=1)
    d_inv_sqrt = jnp.where(deg > 0, 1.0 / jnp.sqrt(deg), 0.0)
    return d_inv_sqrt[:, None] * adj * d_inv_sqrt[None, :]


def glorot(key, shape):
    fan_in, fan_out = shape
    limit = jnp.sqrt(6.0 / (fan_in + fan_out))
    return jax.random.uniform(key, shape, jnp.float32, -limit, limit)


# ----------------------------------------------------------------------------
if __name__ == "__main__":
    key = jax.random.PRNGKey(0)
    k_x, k_e, k_w1, k_w2 = jax.random.split(key, 4)

    # Small graph consistent with the module (exercises a 2x2 tile grid after
    # padding N=200 -> 256).
    N = 200
    dim_in, dim_hidden, dim_out = 16, 64, 1
    E = 800

    x = jax.random.normal(k_x, (N, dim_in), dtype=jnp.float32)
    edge_index = jax.random.randint(k_e, (2, E), 0, N, dtype=jnp.int32)

    # Deterministic parameters (PyG GCNConv: glorot weight, zero bias).
    w1 = glorot(k_w1, (dim_in, dim_hidden))
    b1 = jnp.zeros((1, dim_hidden), dtype=jnp.float32)
    w2 = glorot(k_w2, (dim_hidden, dim_out))
    b2 = jnp.zeros((1, dim_out), dtype=jnp.float32)

    a_norm = gcn_normalized_adjacency(edge_index, N)

    out = gnn_q_forward(a_norm, x, w1, b1, w2, b2)
    out = jax.block_until_ready(out)

    # Reference in plain JAX mirroring the kernel's bf16-operand / f32-accum
    # arithmetic (so the tolerance only has to absorb accumulation order).
    f32 = jnp.float32
    hp = jax.lax.Precision.HIGHEST
    abf = a_norm.astype(jnp.bfloat16).astype(f32)
    xbf = x.astype(jnp.bfloat16).astype(f32)
    w1bf = w1.astype(jnp.bfloat16).astype(f32)
    w2bf = w2.astype(jnp.bfloat16).astype(f32)

    xw1 = jnp.dot(xbf, w1bf, precision=hp).astype(jnp.bfloat16).astype(f32)
    h_ref = jnp.maximum(jnp.dot(abf, xw1, precision=hp) + b1, 0.0)
    hbf = h_ref.astype(jnp.bfloat16).astype(f32)
    xw2 = jnp.dot(hbf, w2bf, precision=hp).astype(jnp.bfloat16).astype(f32)
    ref = jnp.dot(abf, xw2, precision=hp) + b2

    assert out.shape == (N, dim_out)
    max_err = jnp.max(jnp.abs(out - ref))
    assert jnp.allclose(out, ref, atol=1e-3, rtol=1e-3), f"max_err={max_err}"

    print("KERNEL_OK")
</pallas_src>

<mosaic_0001>
module attributes {stable_mosaic.version = 11 : i64} {
  func.func @gcn_layer_kernel(%arg0: i32, %arg1: i32, %arg2: memref<128x128xbf16, #tpu.memory_space<vmem>>, %arg3: memref<128x128xbf16, #tpu.memory_space<vmem>>, %arg4: memref<128x128xbf16, #tpu.memory_space<vmem>>, %arg5: memref<1x128xf32, #tpu.memory_space<vmem>>, %arg6: memref<128x128xbf16, #tpu.memory_space<vmem>>, %arg7: memref<128x128xf32, #tpu.memory_space<vmem>>) attributes {dimension_semantics = [#tpu.dimension_semantics<parallel>, #tpu.dimension_semantics<arbitrary>], iteration_bounds = array<i64: 2, 2>, scalar_prefetch = 0 : i64, scratch_operands = 1 : i64, tpu.core_type = #tpu.core_type<tc>, window_params = [{transform_indices = @transform_0, window_bounds = array<i64: 128, 128>}, {transform_indices = @transform_1, window_bounds = array<i64: 128, 128>}, {pipeline_mode = #tpu.pipeline_mode<synchronous>, transform_indices = @transform_2, window_bounds = array<i64: 128, 128>}, {pipeline_mode = #tpu.pipeline_mode<synchronous>, transform_indices = @transform_3, window_bounds = array<i64: 1, 128>}, {transform_indices = @transform_4, window_bounds = array<i64: 128, 128>}]} {
    %c0_i32 = arith.constant 0 : i32
    %0 = arith.cmpi eq, %arg1, %c0_i32 : i32
    %1 = arith.extui %0 : i1 to i32
    %c0_i32_0 = arith.constant 0 : i32
    %2 = arith.cmpi ne, %1, %c0_i32_0 : i32
    scf.if %2 {
      %cst_12 = arith.constant 0.000000e+00 : f32
      %15 = vector.broadcast %cst_12 : f32 to vector<128x128xf32>
      %c0_13 = arith.constant 0 : index
      %c0_14 = arith.constant 0 : index
      %16 = vector.load %arg7[%c0_13, %c0_14] : memref<128x128xf32, #tpu.memory_space<vmem>>, vector<128x128xf32>
      tpu.vector_store %arg7[%c0_13, %c0_14], %15 {strides = array<i32>} : memref<128x128xf32, #tpu.memory_space<vmem>>, vector<128x128xf32>,
    } else {
    }
    %c0 = arith.constant 0 : index
    %c0_1 = arith.constant 0 : index
    %3 = vector.load %arg3[%c0, %c0_1] : memref<128x128xbf16, #tpu.memory_space<vmem>>, vector<128x128xbf16>
    %c0_2 = arith.constant 0 : index
    %c0_3 = arith.constant 0 : index
    %4 = vector.load %arg4[%c0_2, %c0_3] : memref<128x128xbf16, #tpu.memory_space<vmem>>, vector<128x128xbf16>
    %cst = arith.constant dense<0.000000e+00> : vector<128x128xf32>
    %5 = tpu.matmul %3, %4, %cst {dimension_numbers = #tpu.dot_dimension_numbers<[1], [0], [0], [1], [0, 0, 1, 1], [], []>} : vector<128x128xbf16>, vector<128x128xbf16>, vector<128x128xf32> -> vector<128x128xf32>
    %c0_4 = arith.constant 0 : index
    %c0_5 = arith.constant 0 : index
    %6 = vector.load %arg7[%c0_4, %c0_5] : memref<128x128xf32, #tpu.memory_space<vmem>>, vector<128x128xf32>
    %c0_6 = arith.constant 0 : index
    %c0_7 = arith.constant 0 : index
    %7 = vector.load %arg2[%c0_6, %c0_7] : memref<128x128xbf16, #tpu.memory_space<vmem>>, vector<128x128xbf16>
    %8 = arith.truncf %5 : vector<128x128xf32> to vector<128x128xbf16>
    %cst_8 = arith.constant dense<0.000000e+00> : vector<128x128xf32>
    %9 = tpu.matmul %7, %8, %cst_8 {dimension_numbers = #tpu.dot_dimension_numbers<[1], [0], [0], [1], [0, 0, 1, 1], [], []>} : vector<128x128xbf16>, vector<128x128xbf16>, vector<128x128xf32> -> vector<128x128xf32>
    %10 = arith.addf %6, %9 : vector<128x128xf32>
    %c0_9 = arith.constant 0 : index
    %c0_10 = arith.constant 0 : index
    %11 = vector.load %arg7[%c0_9, %c0_10] : memref<128x128xf32, #tpu.memory_space<vmem>>, vector<128x128xf32>
    tpu.vector_store %arg7[%c0_9, %c0_10], %10 {strides = array<i32>} : memref<128x128xf32, #tpu.memory_space<vmem>>, vector<128x128xf32>,
    %c1_i32 = arith.constant 1 : i32
    %12 = arith.cmpi eq, %arg1, %c1_i32 : i32
    %13 = arith.extui %12 : i1 to i32
    %c0_i32_11 = arith.constant 0 : i32
    %14 = arith.cmpi ne, %13, %c0_i32_11 : i32
    scf.if %14 {
      %c0_12 = arith.constant 0 : index
      %c0_13 = arith.constant 0 : index
      %15 = vector.load %arg7[%c0_12, %c0_13] : memref<128x128xf32, #tpu.memory_space<vmem>>, vector<128x128xf32>
      %c0_14 = arith.constant 0 : index
      %c0_15 = arith.constant 0 : index
      %16 = vector.load %arg5[%c0_14, %c0_15] : memref<1x128xf32, #tpu.memory_space<vmem>>, vector<1x128xf32>
      %17 = vector.broadcast %16 : vector<1x128xf32> to vector<128x128xf32>
      %18 = arith.addf %15, %17 : vector<128x128xf32>
      %cst_16 = arith.constant 0.000000e+00 : f32
      %19 = vector.broadcast %cst_16 : f32 to vector<128x128xf32>
      %20 = arith.maximumf %18, %19 : vector<128x128xf32>
      %21 = arith.truncf %20 : vector<128x128xf32> to vector<128x128xbf16>
      %c0_17 = arith.constant 0 : index
      %c0_18 = arith.constant 0 : index
      %22 = vector.load %arg6[%c0_17, %c0_18] : memref<128x128xbf16, #tpu.memory_space<vmem>>, vector<128x128xbf16>
      tpu.vector_store %arg6[%c0_17, %c0_18], %21 {strides = array<i32>} : memref<128x128xbf16, #tpu.memory_space<vmem>>, vector<128x128xbf16>,
    } else {
    }
    return
  }
  func.func @transform_0(%arg0: i32, %arg1: i32) -> (i32, i32) {
    %c0_i32 = arith.constant 0 : i32
    return %arg0, %arg1 : i32, i32
  }
  func.func @transform_1(%arg0: i32, %arg1: i32) -> (i32, i32) {
    %c0_i32 = arith.constant 0 : i32
    %c0_i32_0 = arith.constant 0 : i32
    return %arg1, %c0_i32 : i32, i32
  }
  func.func @transform_2(%arg0: i32, %arg1: i32) -> (i32, i32) {
    %c0_i32 = arith.constant 0 : i32
    %c0_i32_0 = arith.constant 0 : i32
    %c0_i32_1 = arith.constant 0 : i32
    return %c0_i32, %c0_i32_0 : i32, i32
  }
  func.func @transform_3(%arg0: i32, %arg1: i32) -> (i32, i32) {
    %c0_i32 = arith.constant 0 : i32
    %c0_i32_0 = arith.constant 0 : i32
    %c0_i32_1 = arith.constant 0 : i32
    return %c0_i32, %c0_i32_0 : i32, i32
  }
  func.func @transform_4(%arg0: i32, %arg1: i32) -> (i32, i32) {
    %c0_i32 = arith.constant 0 : i32
    %c0_i32_0 = arith.constant 0 : i32
    return %arg0, %c0_i32 : i32, i32
  }
}

</mosaic_0001>

<llo_original>
// kernel: tpu_custom_call.1
$region0: #{tpu_custom_call.1}
  #allocation0 [shape = 'u32[]', space=smem, size = 0x4, offset = 0x4, fixed_abs, tag = 'smem constant byte address 0x4 - core index']
  #allocation1 [shape = 'u32[144,128]{1,0:T(1,128)}', space=vmem, size = 0x12000, scoped, tag = 'internal scratch']
  #allocation2 [shape = 'f32[128,128]{1,0:T(8,128)}', space=vmem, size = 0x10000, scoped, tag = 'scratch operand']
  %s0 = inlined_call_operand.hbm [shape: bf16[256,256], index: 0, kind: input, shape index: {}]
  %s1 = inlined_call_operand.hbm [shape: bf16[256,128], index: 1, kind: input, shape index: {}]
  %s2 = inlined_call_operand.hbm [shape: bf16[128,128], index: 2, kind: input, shape index: {}]
  %s3 = inlined_call_operand.vmem [shape: f32[1,128], index: 3, kind: input, shape index: {}]
  %s4 = inlined_call_operand.hbm [shape: bf16[256,128], index: 4, kind: output, shape index: {}]
  %s5 = sld [smem:[#allocation0]]
  $region69: #{tpu_custom_call.1} parent=0
    _
  %s7 = ssub.s32 1, %s5
  %s8 = scalar_select 0, %s7, %s5
  $region1: #{tpu_custom_call.1} parent=0
    #allocation3 [shape = 'u8[65536]{0}', space=vmem, size = 0x10000, scoped, tag = 'input window, operand 0']
    #allocation4 [shape = 's32[2]{0}', space=sflag, size = 0x8, scoped, tag = 'scoped memory for tpu_custom_call.1']
    #allocation5 [shape = 's32[2]{0}', space=sflag, size = 0x8, scoped, tag = 'scoped memory for tpu_custom_call.1']
    #allocation6 [shape = 'u8[65536]{0}', space=vmem, size = 0x10000, scoped, tag = 'input window, operand 1']
    #allocation7 [shape = 's32[2]{0}', space=sflag, size = 0x8, scoped, tag = 'scoped memory for tpu_custom_call.1']
    #allocation8 [shape = 'u8[32768]{0}', space=vmem, size = 0x8000, scoped, tag = 'input window, operand 2, single buffered']
    #allocation9 [shape = 'u8[65536]{0}', space=vmem, size = 0x10000, scoped, tag = 'output window, operand 0']
    %9 = vsyncpa [#allocation4], 0
    %s10 = scalar_lea.sflag [#allocation4], 1
    %11 = vsyncpa %s10, 0
    %12 = vsyncpa [#allocation7], 0
    %s13 = scalar_lea.sflag [#allocation7], 1
    %14 = vsyncpa %s13, 0
    %15 = vsyncpa [#allocation5], 0
    %s16 = scalar_lea.sflag [#allocation5], 1
    %17 = vsyncpa %s16, 0
    loop: start=0, step=1, limit=6
    $region2: #{tpu_custom_call.1} parent=1 // loop_pre_header
      _
    $region3: #{tpu_custom_call.1} parent=1 // loop_header
      %s19 = sphi 0, %s23
      %p20 = scmp.ge.s32.totalorder %s19, 6
      %s26 = sphi 0, %s38
      %s27 = sphi 0, %s34
      %s28 = sphi 0, %s26
      %s29 = sphi 0, %s27
      %s30 = sphi 0, %s28
      %s31 = sphi 0, %s29
      %s43 = sphi 0, %s45
      %s46 = sphi 0, %s43
      %s47 = sphi 0, %s46
      %s63 = sphi 0, %s47
      %s69 = sphi 0, %s71
      %s72 = sphi 0, %s69
      %s73 = sphi 0, %s72
      %s89 = sphi 0, %s73
      %s93 = sphi 0, %s93
      %s95 = sphi 0, %s93
      %s96 = sphi 0, %s95
      %s110 = sphi 0, %s96
      %s114 = sphi 0, %s114
      %s116 = sphi 0, %s114
      %s117 = sphi 0, %s116
      %s131 = sphi 0, %s117
      %s137 = sphi 0, %s139
      %s140 = sphi 0, %s137
      %s141 = sphi 0, %s140
      %s157 = sphi 0, %s141
    $region4: #{tpu_custom_call.1} parent=1 // loop_header_branch
      %22 = sbr.rel (%p20) target = $region8
    $region5: #{tpu_custom_call.1} parent=1 // loop_body
      %s24 = ssub.s32 %s19, 1
      %s25 = ssub.s32 %s19, 2
      %s32 = sadd.s32 1, %s27
      %p33 = scmp.ge.s32.totalorder %s32, 2
      %s34 = scalar_select %p33, 0, %s32
      %s35 = sadd.s32 1, %s26
      %s36 = scalar_select %p33, %s35, %s26
      %p37 = scmp.ge.s32.totalorder %s36, 2
      %s38 = scalar_select %p37, 0, %s36
      %s39 = ssub.s32 %s26, %s38
      %s40 = ssub.s32 %s27, %s34
      %s41 = sor.u32 %s39, %s40
      %p42 = scmp.eq.s32.totalorder %s41, 0
      %s44 = sadd.s32 %s43, 1
      %s45 = scalar_select %p42, %s43, %s44
      %p48 = pneg %p42
      %p49 = scmp.eq.s32.totalorder %s19, 3
      %p50 = por %p48, %p49
      %p51 = scmp.ne.s32.totalorder %s43, %s46
      %p52 = scmp.eq.s32.totalorder %s19, 0
      %p53 = por %p51, %p52
      %p54 = scmp.ne.s32.totalorder %s43, %s46
      %p55 = scmp.eq.s32.totalorder %s24, 3
      %p56 = por %p54, %p55
      %p57 = scmp.ne.s32.totalorder %s46, %s47
      %p58 = scmp.eq.s32.totalorder %s24, 0
      %p59 = por %p57, %p58
      %p60 = scmp.ne.s32.totalorder %s46, %s47
      %p61 = scmp.eq.s32.totalorder %s25, 3
      %p62 = por %p60, %p61
      %p64 = scmp.ne.s32.totalorder %s47, %s63
      %p65 = scmp.eq.s32.totalorder %s25, 0
      %p66 = por %p64, %p65
      %s67 = ssub.s32 %s27, %s34
      %p68 = scmp.eq.s32.totalorder %s67, 0
      %s70 = sadd.s32 %s69, 1
      %s71 = scalar_select %p68, %s69, %s70
      %p74 = pneg %p68
      %p75 = scmp.eq.s32.totalorder %s19, 3
      %p76 = por %p74, %p75
      %p77 = scmp.ne.s32.totalorder %s69, %s72
      %p78 = scmp.eq.s32.totalorder %s19, 0
      %p79 = por %p77, %p78
      %p80 = scmp.ne.s32.totalorder %s69, %s72
      %p81 = scmp.eq.s32.totalorder %s24, 3
      %p82 = por %p80, %p81
      %p83 = scmp.ne.s32.totalorder %s72, %s73
      %p84 = scmp.eq.s32.totalorder %s24, 0
      %p85 = por %p83, %p84
      %p86 = scmp.ne.s32.totalorder %s72, %s73
      %p87 = scmp.eq.s32.totalorder %s25, 3
      %p88 = por %p86, %p87
      %p90 = scmp.ne.s32.totalorder %s73, %s89
      %p91 = scmp.eq.s32.totalorder %s25, 0
      %p92 = por %p90, %p91
      %s94 = sadd.s32 %s93, 1
      %p97 = scmp.eq.s32.totalorder %s19, 3
      %p98 = scmp.ne.s32.totalorder %s93, %s95
      %p99 = scmp.eq.s32.totalorder %s19, 0
      %p100 = por %p98, %p99
      %p101 = scmp.ne.s32.totalorder %s93, %s95
      %p102 = scmp.eq.s32.totalorder %s24, 3
      %p103 = por %p101, %p102
      %p104 = scmp.ne.s32.totalorder %s95, %s96
      %p105 = scmp.eq.s32.totalorder %s24, 0
      %p106 = por %p104, %p105
      %p107 = scmp.ne.s32.totalorder %s95, %s96
      %p108 = scmp.eq.s32.totalorder %s25, 3
      %p109 = por %p107, %p108
      %p111 = scmp.ne.s32.totalorder %s96, %s110
      %p112 = scmp.eq.s32.totalorder %s25, 0
      %p113 = por %p111, %p112
      %s115 = sadd.s32 %s114, 1
      %p118 = scmp.eq.s32.totalorder %s19, 3
      %p119 = scmp.ne.s32.totalorder %s114, %s116
      %p120 = scmp.eq.s32.totalorder %s19, 0
      %p121 = por %p119, %p120
      %p122 = scmp.ne.s32.totalorder %s114, %s116
      %p123 = scmp.eq.s32.totalorder %s24, 3
      %p124 = por %p122, %p123
      %p125 = scmp.ne.s32.totalorder %s116, %s117
      %p126 = scmp.eq.s32.totalorder %s24, 0
      %p127 = por %p125, %p126
      %p128 = scmp.ne.s32.totalorder %s116, %s117
      %p129 = scmp.eq.s32.totalorder %s25, 3
      %p130 = por %p128, %p129
      %p132 = scmp.ne.s32.totalorder %s117, %s131
      %p133 = scmp.eq.s32.totalorder %s25, 0
      %p134 = por %p132, %p133
      %s135 = ssub.s32 %s26, %s38
      %p136 = scmp.eq.s32.totalorder %s135, 0
      %s138 = sadd.s32 %s137, 1
      %s139 = scalar_select %p136, %s137, %s138
      %p142 = pneg %p136
      %p143 = scmp.eq.s32.totalorder %s19, 3
      %p144 = por %p142, %p143
      %p145 = scmp.ne.s32.totalorder %s137, %s140
      %p146 = scmp.eq.s32.totalorder %s19, 0
      %p147 = por %p145, %p146
      %p148 = scmp.ne.s32.totalorder %s137, %s140
      %p149 = scmp.eq.s32.totalorder %s24, 3
      %p150 = por %p148, %p149
      %p151 = scmp.ne.s32.totalorder %s140, %s141
      %p152 = scmp.eq.s32.totalorder %s24, 0
      %p153 = por %p151, %p152
      %p154 = scmp.ne.s32.totalorder %s140, %s141
      %p155 = scmp.eq.s32.totalorder %s25, 3
      %p156 = por %p154, %p155
      %p158 = scmp.ne.s32.totalorder %s141, %s157
      %p159 = scmp.eq.s32.totalorder %s25, 0
      %p160 = por %p158, %p159
      %p161 = scmp.le.s32.totalorder 1, %s19
      %p162 = scmp.lt.s32.totalorder %s19, 5
      %p163 = pnand %p161, %p162
      %p164 = pneg %p163
      // Predicated region
      $region9: #{tpu_custom_call.1} parent=5 // pred_check
        _
      $region10: #{tpu_custom_call.1} parent=5 // pred_check_branch
        %166 = sbr.rel (%p163) target = $region12
      $region11: #{tpu_custom_call.1} parent=5 // pred_region
        %s167 = ssub.s32 %s19, 1
        // Predicated region
        $region13: #{tpu_custom_call.1} parent=11 // pred_check
          %p168 = pneg %p106
        $region14: #{tpu_custom_call.1} parent=11 // pred_check_branch
          %170 = sbr.rel (%p168) target = $region16
        $region15: #{tpu_custom_call.1} parent=11 // pred_region
          %s172 = ssub.s32 1024, 1024
          %173 = vsyncadd [#allocation7], %s172
          %s174 = sshll.u32 [#allocation8], 4
          %s175 = int_to_ptr.vmem [resolvable:$true] %s174
          %180 = dma.hbm_to_vmem [thread:$0]  %s2, 1024, %s175, [#allocation7], 64, 64, 4
        $region16: #{tpu_custom_call.1} parent=11 // pred_fallthru
          _
        // Predicated region
        $region17: #{tpu_custom_call.1} parent=11 // pred_check
          %p181 = pneg %p127
        $region18: #{tpu_custom_call.1} parent=11 // pred_check_branch
          %183 = sbr.rel (%p181) target = $region20
        $region19: #{tpu_custom_call.1} parent=11 // pred_region
          _
        $region20: #{tpu_custom_call.1} parent=11 // pred_fallthru
          _
      $region12: #{tpu_custom_call.1} parent=5 // pred_fallthru
        _
      %p184 = scmp.lt.s32.totalorder %s19, 4
      // Predicated region
      $region21: #{tpu_custom_call.1} parent=5 // pred_check
        %p185 = pneg %p184
      $region22: #{tpu_custom_call.1} parent=5 // pred_check_branch
        %187 = sbr.rel (%p185) target = $region24
      $region23: #{tpu_custom_call.1} parent=5 // pred_region
        // Predicated region
        $region25: #{tpu_custom_call.1} parent=23 // pred_check
          %p188 = pneg %p53
        $region26: #{tpu_custom_call.1} parent=23 // pred_check_branch
          %190 = sbr.rel (%p188) target = $region28
        $region27: #{tpu_custom_call.1} parent=23 // pred_region
          %s191 = sand.u32 %s43, 1
          %s192 = scalar_lea.sflag [#allocation4], %s191
          %s193 = sand.u32 %s43, 1
          %s194 = smul.addr %s193, 64
          %s195 = scalar_lea.vmem [#allocation3], %s194
          %s196 = smul.u32 16, %s26
          %s198 = ssub.s32 1024, 1024
          %199 = vsyncadd %s192, %s198
          %s200 = smul.addr %s196, 2
          %s201 = sadd.s32 %s27, %s200
          %s202 = smul.addr %s201, 64
          %s203 = scalar_lea.hbm %s0, %s202
          %s204 = sshll.u32 %s195, 4
          %s205 = int_to_ptr.vmem [resolvable:$true] %s204
          %210 = dma.hbm_to_vmem [thread:$0]  %s203, 1024, %s205, %s192, 128, 64, 4
        $region28: #{tpu_custom_call.1} parent=23 // pred_fallthru
          _
        // Predicated region
        $region29: #{tpu_custom_call.1} parent=23 // pred_check
          %p211 = pneg %p79
        $region30: #{tpu_custom_call.1} parent=23 // pred_check_branch
          %213 = sbr.rel (%p211) target = $region32
        $region31: #{tpu_custom_call.1} parent=23 // pred_region
          %s214 = sand.u32 %s19, 1
          %s215 = scalar_lea.sflag [#allocation7], %s214
          %s216 = sand.u32 %s69, 1
          %s217 = smul.addr %s216, 64
          %s218 = scalar_lea.vmem [#allocation6], %s217
          %s219 = smul.u32 16, %s27
          %s221 = ssub.s32 1024, 1024
          %222 = vsyncadd %s215, %s221
          %s223 = smul.addr %s219, 64
          %s224 = scalar_lea.hbm %s1, %s223
          %s225 = sshll.u32 %s218, 4
          %s226 = int_to_ptr.vmem [resolvable:$true] %s225
          %231 = dma.hbm_to_vmem [thread:$0]  %s224, 1024, %s226, %s215, 64, 64, 4
        $region32: #{tpu_custom_call.1} parent=23 // pred_fallthru
          _
      $region24: #{tpu_custom_call.1} parent=5 // pred_fallthru
        _
      %p232 = scmp.le.s32.totalorder 1, %s19
      %p233 = scmp.lt.s32.totalorder %s19, 5
      %p234 = pnand %p232, %p233
      %p235 = pneg %p234
      // Predicated region
      $region33: #{tpu_custom_call.1} parent=5 // pred_check
        _
      $region34: #{tpu_custom_call.1} parent=5 // pred_check_branch
        %237 = sbr.rel (%p234) target = $region36
      $region35: #{tpu_custom_call.1} parent=5 // pred_region
        %s238 = ssub.s32 %s19, 1
        %s239 = sand.u32 %s46, 1
        %s240 = scalar_lea.sflag [#allocation4], %s239
        %s241 = sand.u32 %s46, 1
        %s242 = smul.addr %s241, 64
        %s243 = scalar_lea.vmem [#allocation3], %s242
        // Predicated region
        $region37: #{tpu_custom_call.1} parent=35 // pred_check
          %p244 = pneg %p59
        $region38: #{tpu_custom_call.1} parent=35 // pred_check_branch
          %246 = sbr.rel (%p244) target = $region40
        $region39: #{tpu_custom_call.1} parent=35 // pred_region
          %247 = dma.done %s240, 1024
        $region40: #{tpu_custom_call.1} parent=35 // pred_fallthru
          _
        %s248 = sand.u32 %s24, 1
        %s249 = scalar_lea.sflag [#allocation7], %s248
        %s250 = sand.u32 %s72, 1
        %s251 = smul.addr %s250, 64
        %s252 = scalar_lea.vmem [#allocation6], %s251
        // Predicated region
        $region41: #{tpu_custom_call.1} parent=35 // pred_check
          %p253 = pneg %p85
        $region42: #{tpu_custom_call.1} parent=35 // pred_check_branch
          %255 = sbr.rel (%p253) target = $region44
        $region43: #{tpu_custom_call.1} parent=35 // pred_region
          %256 = dma.done %s249, 1024
        $region44: #{tpu_custom_call.1} parent=35 // pred_fallthru
          _
        // Predicated region
        $region45: #{tpu_custom_call.1} parent=35 // pred_check
          %p257 = pneg %p106
        $region46: #{tpu_custom_call.1} parent=35 // pred_check_branch
          %259 = sbr.rel (%p257) target = $region48
        $region47: #{tpu_custom_call.1} parent=35 // pred_region
          %260 = dma.done [#allocation7], 1024
        $region48: #{tpu_custom_call.1} parent=35 // pred_fallthru
          _
        %s261 = sand.u32 %s46, 1
        %s262 = scalar_lea.sflag [#allocation4], %s261
        %s263 = sand.u32 %s46, 1
        %s264 = smul.addr %s263, 64
        %s265 = scalar_lea.vmem [#allocation3], %s264
        %p266 = pneg %p59
        %p267 = pneg %p56
        %s268 = sand.u32 %s24, 1
        %s269 = scalar_lea.sflag [#allocation7], %s268
        %s270 = sand.u32 %s72, 1
        %s271 = smul.addr %s270, 64
        %s272 = scalar_lea.vmem [#allocation6], %s271
        %p273 = pneg %p85
        %p274 = pneg %p82
        %p275 = pneg %p106
        %p276 = pneg %p103
        %p277 = pneg %p127
        %p278 = pneg %p124
        %p279 = pneg %p153
        %p280 = pneg %p150
        %s281 = sand.u32 %s140, 1
        %s282 = scalar_lea.sflag [#allocation5], %s281
        %s283 = sand.u32 %s140, 1
        %s284 = smul.addr %s283, 64
        %s285 = scalar_lea.vmem [#allocation9], %s284
        %s286 = smul.u32 16, %s28
        %s287 = smul.u32 16, %s29
        %s288 = smul.u32 16, %s28
        %p290 = scmp.eq.s32.totalorder %s29, 0
        // Predicated region
        $region49: #{tpu_custom_call.1} parent=35 // pred_check
          %p291 = pneg %p290
        $region50: #{tpu_custom_call.1} parent=35 // pred_check_branch
          %293 = sbr.rel (%p291) target = $region52
        $region51: #{tpu_custom_call.1} parent=35 // pred_region
          %294 = vst [vmem:[#allocation2] sm:$0xff] 0.0
          %295 = vst [vmem:[#allocation2 + $0x8] sm:$0xff] 0.0
          %296 = vst [vmem:[#allocation2 + $0x10] sm:$0xff] 0.0
          %297 = vst [vmem:[#allocation2 + $0x18] sm:$0xff] 0.0
          %298 = vst [vmem:[#allocation2 + $0x20] sm:$0xff] 0.0
          %299 = vst [vmem:[#allocation2 + $0x28] sm:$0xff] 0.0
          %300 = vst [vmem:[#allocation2 + $0x30] sm:$0xff] 0.0
          %301 = vst [vmem:[#allocation2 + $0x38] sm:$0xff] 0.0
          %302 = vst [vmem:[#allocation2 + $0x40] sm:$0xff] 0.0
          %303 = vst [vmem:[#allocation2 + $0x48] sm:$0xff] 0.0
          %304 = vst [vmem:[#allocation2 + $0x50] sm:$0xff] 0.0
          %305 = vst [vmem:[#allocation2 + $0x58] sm:$0xff] 0.0
          %306 = vst [vmem:[#allocation2 + $0x60] sm:$0xff] 0.0
          %307 = vst [vmem:[#allocation2 + $0x68] sm:$0xff] 0.0
          %308 = vst [vmem:[#allocation2 + $0x70] sm:$0xff] 0.0
          %309 = vst [vmem:[#allocation2 + $0x78] sm:$0xff] 0.0
        $region52: #{tpu_custom_call.1} parent=35 // pred_fallthru
          _
        %v310 = vld [vmem:[%s252] sm:$0xf]
        %v311 = vld [vmem:[%s252 + $0x4] sm:$0xf]
        %v312 = vld [vmem:[%s252 + $0x8] sm:$0xf]
        %v313 = vld [vmem:[%s252 + $0xc] sm:$0xf]
        %v314 = vld [vmem:[%s252 + $0x10] sm:$0xf]
        %v315 = vld [vmem:[%s252 + $0x14] sm:$0xf]
        %v316 = vld [vmem:[%s252 + $0x18] sm:$0xf]
        %v317 = vld [vmem:[%s252 + $0x1c] sm:$0xf]
        %v318 = vld [vmem:[%s252 + $0x20] sm:$0xf]
        %v319 = vld [vmem:[%s252 + $0x24] sm:$0xf]
        %v320 = vld [vmem:[%s252 + $0x28] sm:$0xf]
        %v321 = vld [vmem:[%s252 + $0x2c] sm:$0xf]
        %v322 = vld [vmem:[%s252 + $0x30] sm:$0xf]
        %v323 = vld [vmem:[%s252 + $0x34] sm:$0xf]
        %v324 = vld [vmem:[%s252 + $0x38] sm:$0xf]
        %v325 = vld [vmem:[%s252 + $0x3c] sm:$0xf]
        %v326 = vld [vmem:[#allocation8] sm:$0xf]
        %v327 = vld [vmem:[#allocation8 + $0x4] sm:$0xf]
        %v328 = vld [vmem:[#allocation8 + $0x8] sm:$0xf]
        %v329 = vld [vmem:[#allocation8 + $0xc] sm:$0xf]
        %v330 = vld [vmem:[#allocation8 + $0x10] sm:$0xf]
        %v331 = vld [vmem:[#allocation8 + $0x14] sm:$0xf]
        %v332 = vld [vmem:[#allocation8 + $0x18] sm:$0xf]
        %v333 = vld [vmem:[#allocation8 + $0x1c] sm:$0xf]
        %v334 = vld [vmem:[#allocation8 + $0x20] sm:$0xf]
        %v335 = vld [vmem:[#allocation8 + $0x24] sm:$0xf]
        %v336 = vld [vmem:[#allocation8 + $0x28] sm:$0xf]
        %v337 = vld [vmem:[#allocation8 + $0x2c] sm:$0xf]
        %v338 = vld [vmem:[#allocation8 + $0x30] sm:$0xf]
        %v339 = vld [vmem:[#allocation8 + $0x34] sm:$0xf]
        %v340 = vld [vmem:[#allocation8 + $0x38] sm:$0xf]
        %v341 = vld [vmem:[#allocation8 + $0x3c] sm:$0xf]
        %v358 = vunpack.c.l.b16 %v310
        %v359 = vunpack.c.l.b16 %v311
        %v360 = vunpack.c.l.b16 %v312
        %v361 = vunpack.c.l.b16 %v313
        %v362 = vunpack.c.l.b16 %v314
        %v363 = vunpack.c.l.b16 %v315
        %v364 = vunpack.c.l.b16 %v316
        %v365 = vunpack.c.l.b16 %v317
        %v366 = vunpack.c.l.b16 %v318
        %v367 = vunpack.c.l.b16 %v319
        %v368 = vunpack.c.l.b16 %v320
        %v369 = vunpack.c.l.b16 %v321
        %v370 = vunpack.c.l.b16 %v322
        %v371 = vunpack.c.l.b16 %v323
        %v372 = vunpack.c.l.b16 %v324
        %v373 = vunpack.c.l.b16 %v325
        %v374 = vpack.c.b16 %v359, %v358
        %v375 = vpack.c.b16 %v361, %v360
        %v376 = vpack.c.b16 %v363, %v362
        %v377 = vpack.c.b16 %v365, %v364
        %v378 = vpack.c.b16 %v367, %v366
        %v379 = vpack.c.b16 %v369, %v368
        %v380 = vpack.c.b16 %v371, %v370
        %v381 = vpack.c.b16 %v373, %v372
        %v406 = vunpack.c.l.b16 %v326
        %v407 = vunpack.c.l.b16 %v327
        %v408 = vunpack.c.l.b16 %v328
        %v409 = vunpack.c.l.b16 %v329
        %v410 = vunpack.c.l.b16 %v330
        %v411 = vunpack.c.l.b16 %v331
        %v412 = vunpack.c.l.b16 %v332
        %v413 = vunpack.c.l.b16 %v333
        %v414 = vunpack.c.l.b16 %v334
        %v415 = vunpack.c.l.b16 %v335
        %v416 = vunpack.c.l.b16 %v336
        %v417 = vunpack.c.l.b16 %v337
        %v418 = vunpack.c.l.b16 %v338
        %v419 = vunpack.c.l.b16 %v339
        %v420 = vunpack.c.l.b16 %v340
        %v421 = vunpack.c.l.b16 %v341
        %v422 = vpack.c.b16 %v407, %v406
        %v423 = vpack.c.b16 %v409, %v408
        %v424 = vpack.c.b16 %v411, %v410
        %v425 = vpack.c.b16 %v413, %v412
        %v426 = vpack.c.b16 %v415, %v414
        %v427 = vpack.c.b16 %v417, %v416
        %v428 = vpack.c.b16 %v419, %v418
        %v429 = vpack.c.b16 %v421, %v420
        %438 = vmatprep.subr.bf16.mxu0 0
        %439 = vmatpush1.bf16.msra.mxu0 %v429
        %440 = vmatprep.subr.bf16.mxu0 0
        %441 = vmatpush1.bf16.msra.mxu0 %v428
        %442 = vmatprep.subr.bf16.mxu0 0
        %443 = vmatpush1.bf16.msra.mxu0 %v427
        %444 = vmatprep.subr.bf16.mxu0 0
        %445 = vmatpush1.bf16.msra.mxu0 %v426
        %446 = vmatprep.subr.bf16.mxu0 0
        %447 = vmatpush1.bf16.msra.mxu0 %v425
        %448 = vmatprep.subr.bf16.mxu0 0
        %449 = vmatpush1.bf16.msra.mxu0 %v424
        %450 = vmatprep.subr.bf16.mxu0 0
        %451 = vmatpush1.bf16.msra.mxu0 %v423
        %452 = vmatprep.subr.bf16.mxu0 0
        %453 = vmatpush1.bf16.msra.mxu0 %v422
        %454 = vmatprep.subr.bf16.mxu0 0
        %455 = vmatpush2.bf16.msra.mxu0 0
        %456 = vmatprep.subr.bf16.mxu0 0
        %457 = vmatpush2.bf16.msra.mxu0 0
        %458 = vmatprep.subr.bf16.mxu0 0
        %459 = vmatpush2.bf16.msra.mxu0 0
        %460 = vmatprep.subr.bf16.mxu0 0
        %461 = vmatpush2.bf16.msra.mxu0 0
        %462 = vmatprep.subr.bf16.mxu0 0
        %463 = vmatpush2.bf16.msra.mxu0 0
        %464 = vmatprep.subr.bf16.mxu0 0
        %465 = vmatpush2.bf16.msra.mxu0 0
        %466 = vmatprep.subr.bf16.mxu0 0
        %467 = vmatpush2.bf16.msra.mxu0 0
        %468 = vmatprep.subr.bf16.mxu0 0
        %469 = vmatpush2.bf16.msra.mxu0 0
        %470 = vmatprep.mubr.bf16.mxu0 0
        %471 = vmatmul.mubr.bf16.gmra.mxu0 %v374
        %v472 = vpop.f32.mrf.mxu0
        %v473 = vadd.f32 0.0, %v472
        %v474 = vpop.f32.mrf.mxu0
        %v475 = vpop.f32.mrf.mxu0
        %v476 = vadd.f32 0.0, %v475
        %v477 = vpop.f32.mrf.mxu0
        %478 = vmatprep.mubr.bf16.mxu0 0
        %479 = vmatmul.mubr.bf16.gmra.mxu0 %v375
        %v480 = vpop.f32.mrf.mxu0
        %v481 = vadd.f32 0.0, %v480
        %v482 = vpop.f32.mrf.mxu0
        %v483 = vpop.f32.mrf.mxu0
        %v484 = vadd.f32 0.0, %v483
        %v485 = vpop.f32.mrf.mxu0
        %486 = vmatprep.mubr.bf16.mxu0 0
        %487 = vmatmul.mubr.bf16.gmra.mxu0 %v376
        %v488 = vpop.f32.mrf.mxu0
        %v489 = vadd.f32 0.0, %v488
        %v490 = vpop.f32.mrf.mxu0
        %v491 = vpop.f32.mrf.mxu0
        %v492 = vadd.f32 0.0, %v491
        %v493 = vpop.f32.mrf.mxu0
        %494 = vmatprep.mubr.bf16.mxu0 0
        %495 = vmatmul.mubr.bf16.gmra.mxu0 %v377
        %v496 = vpop.f32.mrf.mxu0
        %v497 = vadd.f32 0.0, %v496
        %v498 = vpop.f32.mrf.mxu0
        %v499 = vpop.f32.mrf.mxu0
        %v500 = vadd.f32 0.0, %v499
        %v501 = vpop.f32.mrf.mxu0
        %502 = vmatprep.mubr.bf16.mxu0 0
        %503 = vmatmul.mubr.bf16.gmra.mxu0 %v378
        %v504 = vpop.f32.mrf.mxu0
        %v505 = vadd.f32 0.0, %v504
        %v506 = vpop.f32.mrf.mxu0
        %v507 = vpop.f32.mrf.mxu0
        %v508 = vadd.f32 0.0, %v507
        %v509 = vpop.f32.mrf.mxu0
        %510 = vmatprep.mubr.bf16.mxu0 0
        %511 = vmatmul.mubr.bf16.gmra.mxu0 %v379
        %v512 = vpop.f32.mrf.mxu0
        %v513 = vadd.f32 0.0, %v512
        %v514 = vpop.f32.mrf.mxu0
        %v515 = vpop.f32.mrf.mxu0
        %v516 = vadd.f32 0.0, %v515
        %v517 = vpop.f32.mrf.mxu0
        %518 = vmatprep.mubr.bf16.mxu0 0
        %519 = vmatmul.mubr.bf16.gmra.mxu0 %v380
        %v520 = vpop.f32.mrf.mxu0
        %v521 = vadd.f32 0.0, %v520
        %v522 = vpop.f32.mrf.mxu0
        %v523 = vpop.f32.mrf.mxu0
        %v524 = vadd.f32 0.0, %v523
        %v525 = vpop.f32.mrf.mxu0
        %526 = vmatprep.mubr.bf16.mxu0 0
        %527 = vmatmul.mubr.bf16.gmra.mxu0 %v381
        %v528 = vpop.f32.mrf.mxu0
        %v529 = vadd.f32 0.0, %v528
        %v530 = vpop.f32.mrf.mxu0
        %v531 = vpop.f32.mrf.mxu0
        %v532 = vadd.f32 0.0, %v531
        %v533 = vpop.f32.mrf.mxu0
        %534 = vdwg.mxu0
        %v535 = vld [vmem:[#allocation2] sm:$0xff]
        %v536 = vld [vmem:[#allocation2 + $0x8] sm:$0xff]
        %v537 = vld [vmem:[#allocation2 + $0x10] sm:$0xff]
        %v538 = vld [vmem:[#allocation2 + $0x18] sm:$0xff]
        %v539 = vld [vmem:[#allocation2 + $0x20] sm:$0xff]
        %v540 = vld [vmem:[#allocation2 + $0x28] sm:$0xff]
        %v541 = vld [vmem:[#allocation2 + $0x30] sm:$0xff]
        %v542 = vld [vmem:[#allocation2 + $0x38] sm:$0xff]
        %v543 = vld [vmem:[#allocation2 + $0x40] sm:$0xff]
        %v544 = vld [vmem:[#allocation2 + $0x48] sm:$0xff]
        %v545 = vld [vmem:[#allocation2 + $0x50] sm:$0xff]
        %v546 = vld [vmem:[#allocation2 + $0x58] sm:$0xff]
        %v547 = vld [vmem:[#allocation2 + $0x60] sm:$0xff]
        %v548 = vld [vmem:[#allocation2 + $0x68] sm:$0xff]
        %v549 = vld [vmem:[#allocation2 + $0x70] sm:$0xff]
        %v550 = vld [vmem:[#allocation2 + $0x78] sm:$0xff]
        %v551 = vld [vmem:[%s243] sm:$0xf]
        %v552 = vld [vmem:[%s243 + $0x4] sm:$0xf]
        %v553 = vld [vmem:[%s243 + $0x8] sm:$0xf]
        %v554 = vld [vmem:[%s243 + $0xc] sm:$0xf]
        %v555 = vld [vmem:[%s243 + $0x10] sm:$0xf]
        %v556 = vld [vmem:[%s243 + $0x14] sm:$0xf]
        %v557 = vld [vmem:[%s243 + $0x18] sm:$0xf]
        %v558 = vld [vmem:[%s243 + $0x1c] sm:$0xf]
        %v559 = vld [vmem:[%s243 + $0x20] sm:$0xf]
        %v560 = vld [vmem:[%s243 + $0x24] sm:$0xf]
        %v561 = vld [vmem:[%s243 + $0x28] sm:$0xf]
        %v562 = vld [vmem:[%s243 + $0x2c] sm:$0xf]
        %v563 = vld [vmem:[%s243 + $0x30] sm:$0xf]
        %v564 = vld [vmem:[%s243 + $0x34] sm:$0xf]
        %v565 = vld [vmem:[%s243 + $0x38] sm:$0xf]
        %v566 = vld [vmem:[%s243 + $0x3c] sm:$0xf]
        %v567 = vpack.c.bf16 %v476, %v473
        %v568 = vpack.c.bf16 %v484, %v481
        %v569 = vpack.c.bf16 %v492, %v489
        %v570 = vpack.c.bf16 %v500, %v497
        %v571 = vpack.c.bf16 %v508, %v505
        %v572 = vpack.c.bf16 %v516, %v513
        %v573 = vpack.c.bf16 %v524, %v521
        %v574 = vpack.c.bf16 %v532, %v529
        %v591 = vunpack.c.l.b16 %v551
        %v592 = vunpack.c.l.b16 %v552
        %v593 = vunpack.c.l.b16 %v553
        %v594 = vunpack.c.l.b16 %v554
        %v595 = vunpack.c.l.b16 %v555
        %v596 = vunpack.c.l.b16 %v556
        %v597 = vunpack.c.l.b16 %v557
        %v598 = vunpack.c.l.b16 %v558
        %v599 = vunpack.c.l.b16 %v559
        %v600 = vunpack.c.l.b16 %v560
        %v601 = vunpack.c.l.b16 %v561
        %v602 = vunpack.c.l.b16 %v562
        %v603 = vunpack.c.l.b16 %v563
        %v604 = vunpack.c.l.b16 %v564
        %v605 = vunpack.c.l.b16 %v565
        %v606 = vunpack.c.l.b16 %v566
        %v607 = vpack.c.b16 %v592, %v591
        %v608 = vpack.c.b16 %v594, %v593
        %v609 = vpack.c.b16 %v596, %v595
        %v610 = vpack.c.b16 %v598, %v597
        %v611 = vpack.c.b16 %v600, %v599
        %v612 = vpack.c.b16 %v602, %v601
        %v613 = vpack.c.b16 %v604, %v603
        %v614 = vpack.c.b16 %v606, %v605
        %623 = vmatprep.subr.bf16.mxu0 0
        %624 = vmatpush1.bf16.msra.mxu0 %v574
        %625 = vmatprep.subr.bf16.mxu0 0
        %626 = vmatpush1.bf16.msra.mxu0 %v573
        %627 = vmatprep.subr.bf16.mxu0 0
        %628 = vmatpush1.bf16.msra.mxu0 %v572
        %629 = vmatprep.subr.bf16.mxu0 0
        %630 = vmatpush1.bf16.msra.mxu0 %v571
        %631 = vmatprep.subr.bf16.mxu0 0
        %632 = vmatpush1.bf16.msra.mxu0 %v570
        %633 = vmatprep.subr.bf16.mxu0 0
        %634 = vmatpush1.bf16.msra.mxu0 %v569
        %635 = vmatprep.subr.bf16.mxu0 0
        %636 = vmatpush1.bf16.msra.mxu0 %v568
        %637 = vmatprep.subr.bf16.mxu0 0
        %638 = vmatpush1.bf16.msra.mxu0 %v567
        %639 = vmatprep.subr.bf16.mxu0 0
        %640 = vmatpush2.bf16.msra.mxu0 0
        %641 = vmatprep.subr.bf16.mxu0 0
        %642 = vmatpush2.bf16.msra.mxu0 0
        %643 = vmatprep.subr.bf16.mxu0 0
        %644 = vmatpush2.bf16.msra.mxu0 0
        %645 = vmatprep.subr.bf16.mxu0 0
        %646 = vmatpush2.bf16.msra.mxu0 0
        %647 = vmatprep.subr.bf16.mxu0 0
        %648 = vmatpush2.bf16.msra.mxu0 0
        %649 = vmatprep.subr.bf16.mxu0 0
        %650 = vmatpush2.bf16.msra.mxu0 0
        %651 = vmatprep.subr.bf16.mxu0 0
        %652 = vmatpush2.bf16.msra.mxu0 0
        %653 = vmatprep.subr.bf16.mxu0 0
        %654 = vmatpush2.bf16.msra.mxu0 0
        %655 = vmatprep.mubr.bf16.mxu0 0
        %656 = vmatmul.mubr.bf16.gmra.mxu0 %v607
        %v657 = vpop.f32.mrf.mxu0
        %v658 = vadd.f32 0.0, %v657
        %v659 = vpop.f32.mrf.mxu0
        %v660 = vpop.f32.mrf.mxu0
        %v661 = vadd.f32 0.0, %v660
        %v662 = vpop.f32.mrf.mxu0
        %663 = vmatprep.mubr.bf16.mxu0 0
        %664 = vmatmul.mubr.bf16.gmra.mxu0 %v608
        %v665 = vpop.f32.mrf.mxu0
        %v666 = vadd.f32 0.0, %v665
        %v667 = vpop.f32.mrf.mxu0
        %v668 = vpop.f32.mrf.mxu0
        %v669 = vadd.f32 0.0, %v668
        %v670 = vpop.f32.mrf.mxu0
        %671 = vmatprep.mubr.bf16.mxu0 0
        %672 = vmatmul.mubr.bf16.gmra.mxu0 %v609
        %v673 = vpop.f32.mrf.mxu0
        %v674 = vadd.f32 0.0, %v673
        %v675 = vpop.f32.mrf.mxu0
        %v676 = vpop.f32.mrf.mxu0
        %v677 = vadd.f32 0.0, %v676
        %v678 = vpop.f32.mrf.mxu0
        %679 = vmatprep.mubr.bf16.mxu0 0
        %680 = vmatmul.mubr.bf16.gmra.mxu0 %v610
        %v681 = vpop.f32.mrf.mxu0
        %v682 = vadd.f32 0.0, %v681
        %v683 = vpop.f32.mrf.mxu0
        %v684 = vpop.f32.mrf.mxu0
        %v685 = vadd.f32 0.0, %v684
        %v686 = vpop.f32.mrf.mxu0
        %687 = vmatprep.mubr.bf16.mxu0 0
        %688 = vmatmul.mubr.bf16.gmra.mxu0 %v611
        %v689 = vpop.f32.mrf.mxu0
        %v690 = vadd.f32 0.0, %v689
        %v691 = vpop.f32.mrf.mxu0
        %v692 = vpop.f32.mrf.mxu0
        %v693 = vadd.f32 0.0, %v692
        %v694 = vpop.f32.mrf.mxu0
        %695 = vmatprep.mubr.bf16.mxu0 0
        %696 = vmatmul.mubr.bf16.gmra.mxu0 %v612
        %v697 = vpop.f32.mrf.mxu0
        %v698 = vadd.f32 0.0, %v697
        %v699 = vpop.f32.mrf.mxu0
        %v700 = vpop.f32.mrf.mxu0
        %v701 = vadd.f32 0.0, %v700
        %v702 = vpop.f32.mrf.mxu0
        %703 = vmatprep.mubr.bf16.mxu0 0
        %704 = vmatmul.mubr.bf16.gmra.mxu0 %v613
        %v705 = vpop.f32.mrf.mxu0
        %v706 = vadd.f32 0.0, %v705
        %v707 = vpop.f32.mrf.mxu0
        %v708 = vpop.f32.mrf.mxu0
        %v709 = vadd.f32 0.0, %v708
        %v710 = vpop.f32.mrf.mxu0
        %711 = vmatprep.mubr.bf16.mxu0 0
        %712 = vmatmul.mubr.bf16.gmra.mxu0 %v614
        %v713 = vpop.f32.mrf.mxu0
        %v714 = vadd.f32 0.0, %v713
        %v715 = vpop.f32.mrf.mxu0
        %v716 = vpop.f32.mrf.mxu0
        %v717 = vadd.f32 0.0, %v716
        %v718 = vpop.f32.mrf.mxu0
        %719 = vdwg.mxu0
        %v720 = vadd.f32 %v535, %v658
        %v721 = vadd.f32 %v536, %v661
        %v722 = vadd.f32 %v537, %v666
        %v723 = vadd.f32 %v538, %v669
        %v724 = vadd.f32 %v539, %v674
        %v725 = vadd.f32 %v540, %v677
        %v726 = vadd.f32 %v541, %v682
        %v727 = vadd.f32 %v542, %v685
        %v728 = vadd.f32 %v543, %v690
        %v729 = vadd.f32 %v544, %v693
        %v730 = vadd.f32 %v545, %v698
        %v731 = vadd.f32 %v546, %v701
        %v732 = vadd.f32 %v547, %v706
        %v733 = vadd.f32 %v548, %v709
        %v734 = vadd.f32 %v549, %v714
        %v735 = vadd.f32 %v550, %v717
        %736 = vst [vmem:[#allocation2] sm:$0xff] %v720
        %737 = vst [vmem:[#allocation2 + $0x8] sm:$0xff] %v721
        %738 = vst [vmem:[#allocation2 + $0x10] sm:$0xff] %v722
        %739 = vst [vmem:[#allocation2 + $0x18] sm:$0xff] %v723
        %740 = vst [vmem:[#allocation2 + $0x20] sm:$0xff] %v724
        %741 = vst [vmem:[#allocation2 + $0x28] sm:$0xff] %v725
        %742 = vst [vmem:[#allocation2 + $0x30] sm:$0xff] %v726
        %743 = vst [vmem:[#allocation2 + $0x38] sm:$0xff] %v727
        %744 = vst [vmem:[#allocation2 + $0x40] sm:$0xff] %v728
        %745 = vst [vmem:[#allocation2 + $0x48] sm:$0xff] %v729
        %746 = vst [vmem:[#allocation2 + $0x50] sm:$0xff] %v730
        %747 = vst [vmem:[#allocation2 + $0x58] sm:$0xff] %v731
        %748 = vst [vmem:[#allocation2 + $0x60] sm:$0xff] %v732
        %749 = vst [vmem:[#allocation2 + $0x68] sm:$0xff] %v733
        %750 = vst [vmem:[#allocation2 + $0x70] sm:$0xff] %v734
        %751 = vst [vmem:[#allocation2 + $0x78] sm:$0xff] %v735
        %p752 = scmp.eq.s32.totalorder %s29, 1
        // Predicated region
        $region53: #{tpu_custom_call.1} parent=35 // pred_check
          %p753 = pneg %p752
        $region54: #{tpu_custom_call.1} parent=35 // pred_check_branch
          %755 = sbr.rel (%p753) target = $region56
        $region55: #{tpu_custom_call.1} parent=35 // pred_region
          %v756 = vld [vmem:[#allocation2] sm:$0xff]
          %v757 = vld [vmem:[#allocation2 + $0x8] sm:$0xff]
          %v758 = vld [vmem:[#allocation2 + $0x10] sm:$0xff]
          %v759 = vld [vmem:[#allocation2 + $0x18] sm:$0xff]
          %v760 = vld [vmem:[#allocation2 + $0x20] sm:$0xff]
          %v761 = vld [vmem:[#allocation2 + $0x28] sm:$0xff]
          %v762 = vld [vmem:[#allocation2 + $0x30] sm:$0xff]
          %v763 = vld [vmem:[#allocation2 + $0x38] sm:$0xff]
          %v764 = vld [vmem:[#allocation2 + $0x40] sm:$0xff]
          %v765 = vld [vmem:[#allocation2 + $0x48] sm:$0xff]
          %v766 = vld [vmem:[#allocation2 + $0x50] sm:$0xff]
          %v767 = vld [vmem:[#allocation2 + $0x58] sm:$0xff]
          %v768 = vld [vmem:[#allocation2 + $0x60] sm:$0xff]
          %v769 = vld [vmem:[#allocation2 + $0x68] sm:$0xff]
          %v770 = vld [vmem:[#allocation2 + $0x70] sm:$0xff]
          %v771 = vld [vmem:[#allocation2 + $0x78] sm:$0xff]
          %v772 = vld [vmem:[%s3] sm:$0x1]
          %v774 = vlaneseq
          %v775 = vshrl.u32 %v774, 7
          %v776 = vsub.s32 0, %v775
          %v777 = vrot.slane %v772, %v776
          %v779 = vadd.f32 %v756, %v777
          %v780 = vadd.f32 %v757, %v777
          %v781 = vadd.f32 %v758, %v777
          %v782 = vadd.f32 %v759, %v777
          %v783 = vadd.f32 %v760, %v777
          %v784 = vadd.f32 %v761, %v777
          %v785 = vadd.f32 %v762, %v777
          %v786 = vadd.f32 %v763, %v777
          %v787 = vadd.f32 %v764, %v777
          %v788 = vadd.f32 %v765, %v777
          %v789 = vadd.f32 %v766, %v777
          %v790 = vadd.f32 %v767, %v777
          %v791 = vadd.f32 %v768, %v777
          %v792 = vadd.f32 %v769, %v777
          %v793 = vadd.f32 %v770, %v777
          %v794 = vadd.f32 %v771, %v777
          %v795 = vmax.f32 %v779, 0.0
          %v796 = vmax.f32 %v780, 0.0
          %v797 = vmax.f32 %v781, 0.0
          %v798 = vmax.f32 %v782, 0.0
          %v799 = vmax.f32 %v783, 0.0
          %v800 = vmax.f32 %v784, 0.0
          %v801 = vmax.f32 %v785, 0.0
          %v802 = vmax.f32 %v786, 0.0
          %v803 = vmax.f32 %v787, 0.0
          %v804 = vmax.f32 %v788, 0.0
          %v805 = vmax.f32 %v789, 0.0
          %v806 = vmax.f32 %v790, 0.0
          %v807 = vmax.f32 %v791, 0.0
          %v808 = vmax.f32 %v792, 0.0
          %v809 = vmax.f32 %v793, 0.0
          %v810 = vmax.f32 %v794, 0.0
          %v811 = vpack.c.bf16 %v796, %v795
          %v812 = vpack.c.bf16 %v798, %v797
          %v813 = vpack.c.bf16 %v800, %v799
          %v814 = vpack.c.bf16 %v802, %v801
          %v815 = vpack.c.bf16 %v804, %v803
          %v816 = vpack.c.bf16 %v806, %v805
          %v817 = vpack.c.bf16 %v808, %v807
          %v818 = vpack.c.bf16 %v810, %v809
          %v827 = vunpack.c.l.b16 %v811
          %v828 = vunpack.c.h.b16 %v811
          %v829 = vunpack.c.l.b16 %v812
          %v830 = vunpack.c.h.b16 %v812
          %v831 = vunpack.c.l.b16 %v813
          %v832 = vunpack.c.h.b16 %v813
          %v833 = vunpack.c.l.b16 %v814
          %v834 = vunpack.c.h.b16 %v814
          %v835 = vunpack.c.l.b16 %v815
          %v836 = vunpack.c.h.b16 %v815
          %v837 = vunpack.c.l.b16 %v816
          %v838 = vunpack.c.h.b16 %v816
          %v839 = vunpack.c.l.b16 %v817
          %v840 = vunpack.c.h.b16 %v817
          %v841 = vunpack.c.l.b16 %v818
          %v842 = vunpack.c.h.b16 %v818
          %v843 = vpack.c.b16 %v827, %v827
          %v844 = vpack.c.b16 %v828, %v828
          %v845 = vpack.c.b16 %v829, %v829
          %v846 = vpack.c.b16 %v830, %v830
          %v847 = vpack.c.b16 %v831, %v831
          %v848 = vpack.c.b16 %v832, %v832
          %v849 = vpack.c.b16 %v833, %v833
          %v850 = vpack.c.b16 %v834, %v834
          %v851 = vpack.c.b16 %v835, %v835
          %v852 = vpack.c.b16 %v836, %v836
          %v853 = vpack.c.b16 %v837, %v837
          %v854 = vpack.c.b16 %v838, %v838
          %v855 = vpack.c.b16 %v839, %v839
          %v856 = vpack.c.b16 %v840, %v840
          %v857 = vpack.c.b16 %v841, %v841
          %v858 = vpack.c.b16 %v842, %v842
          %875 = vst [vmem:[%s285] sm:$0xf] %v843
          %876 = vst [vmem:[%s285 + $0x4] sm:$0xf] %v844
          %877 = vst [vmem:[%s285 + $0x8] sm:$0xf] %v845
          %878 = vst [vmem:[%s285 + $0xc] sm:$0xf] %v846
          %879 = vst [vmem:[%s285 + $0x10] sm:$0xf] %v847
          %880 = vst [vmem:[%s285 + $0x14] sm:$0xf] %v848
          %881 = vst [vmem:[%s285 + $0x18] sm:$0xf] %v849
          %882 = vst [vmem:[%s285 + $0x1c] sm:$0xf] %v850
          %883 = vst [vmem:[%s285 + $0x20] sm:$0xf] %v851
          %884 = vst [vmem:[%s285 + $0x24] sm:$0xf] %v852
          %885 = vst [vmem:[%s285 + $0x28] sm:$0xf] %v853
          %886 = vst [vmem:[%s285 + $0x2c] sm:$0xf] %v854
          %887 = vst [vmem:[%s285 + $0x30] sm:$0xf] %v855
          %888 = vst [vmem:[%s285 + $0x34] sm:$0xf] %v856
          %889 = vst [vmem:[%s285 + $0x38] sm:$0xf] %v857
          %890 = vst [vmem:[%s285 + $0x3c] sm:$0xf] %v858
        $region56: #{tpu_custom_call.1} parent=35 // pred_fallthru
          _
        %s891 = sand.u32 %s140, 1
        %s892 = scalar_lea.sflag [#allocation5], %s891
        %s893 = sand.u32 %s140, 1
        %s894 = smul.addr %s893, 64
        %s895 = scalar_lea.vmem [#allocation9], %s894
        // Predicated region
        $region57: #{tpu_custom_call.1} parent=35 // pred_check
          %p896 = pneg %p150
        $region58: #{tpu_custom_call.1} parent=35 // pred_check_branch
          %898 = sbr.rel (%p896) target = $region60
        $region59: #{tpu_custom_call.1} parent=35 // pred_region
          %s899 = smul.u32 16, %s28
          %s901 = ssub.s32 1024, 1024
          %902 = vsyncadd %s892, %s901
          %s903 = smul.addr %s899, 64
          %s904 = scalar_lea.hbm %s4, %s903
          %s905 = sshll.u32 %s895, 4
          %s906 = int_to_ptr.vmem [resolvable:$true] %s905
          %911 = dma.vmem_to_hbm [thread:$0]  %s906, 1024, %s904, %s892, 64, 64, 4
        $region60: #{tpu_custom_call.1} parent=35 // pred_fallthru
          _
      $region36: #{tpu_custom_call.1} parent=5 // pred_fallthru
        _
      %p912 = scmp.le.s32.totalorder 2, %s19
      // Predicated region
      $region61: #{tpu_custom_call.1} parent=5 // pred_check
        %p913 = pneg %p912
      $region62: #{tpu_custom_call.1} parent=5 // pred_check_branch
        %915 = sbr.rel (%p913) target = $region64
      $region63: #{tpu_custom_call.1} parent=5 // pred_region
        %s916 = ssub.s32 %s19, 2
        // Predicated region
        $region65: #{tpu_custom_call.1} parent=63 // pred_check
          %p917 = pneg %p156
        $region66: #{tpu_custom_call.1} parent=63 // pred_check_branch
          %919 = sbr.rel (%p917) target = $region68
        $region67: #{tpu_custom_call.1} parent=63 // pred_region
          %s920 = sand.u32 %s141, 1
          %s921 = scalar_lea.sflag [#allocation5], %s920
          %s922 = sand.u32 %s141, 1
          %s923 = smul.addr %s922, 64
          %s924 = scalar_lea.vmem [#allocation9], %s923
          %925 = dma.done %s921, 1024
        $region68: #{tpu_custom_call.1} parent=63 // pred_fallthru
          _
      $region64: #{tpu_custom_call.1} parent=5 // pred_fallthru
        _
    $region6: #{tpu_custom_call.1} parent=1 // loop_footer
      %s23 = sadd.s32 1, %s19
    $region7: #{tpu_custom_call.1} parent=1 // loop_footer_branch
      %18 = sbr.rel target = $region3
    $region8: #{tpu_custom_call.1} parent=1 // loop_exit
      _
    %926 = vsyncpa [#allocation4], 1
    %s927 = scalar_lea.sflag [#allocation4], 1
    %928 = vsyncpa %s927, 1
    %929 = vsyncpa [#allocation7], 1
    %s930 = scalar_lea.sflag [#allocation7], 1
    %931 = vsyncpa %s930, 1
    %932 = vsyncpa [#allocation5], 1
    %s933 = scalar_lea.sflag [#allocation5], 1
    %934 = vsyncpa %s933, 1

</llo_original>
